<compile_context>
chip_gen: v6e
topology: v6e:2x2x1
jax: 0.10.0
libtpu: 0.0.40
codegen_flags: <defaults>
</compile_context>

<pallas_src>
import jax
import jax.numpy as jnp
from jax.experimental import pallas as pl
from jax.experimental.pallas import tpu as pltpu

LANE = 128      # lane width (last-dim tiling unit)
SUBLANE = 8     # f32 sublane tiling unit


def _round_up(n, m):
    return ((n + m - 1) // m) * m


def qnet_kernel(x_ref, w1_ref, b1_ref, w2_ref, b2_ref, out_ref):
    # linear1: x @ W1t + b1  (MXU matmul, f32 accumulate; weights pre-transposed)
    h = jnp.dot(x_ref[...], w1_ref[...],
                preferred_element_type=jnp.float32) + b1_ref[...]
    # ReLU (VPU elementwise)
    h = jnp.maximum(h, 0.0)
    # linear2: h @ W2t + b2  (cast of h is a no-op for f32 weights; it only
    # matters if bf16 weights are ever supplied, feeding the bf16 MXU path)
    out = jnp.dot(h.astype(w2_ref.dtype), w2_ref[...],
                  preferred_element_type=jnp.float32) + b2_ref[...]
    out_ref[...] = out.astype(out_ref.dtype)


def prepare_params(w1, b1, w2, b2, dtype=None):
    """One-time parameter prep, hoisted out of the forward hot path.

    Takes PyTorch-layout weights (w1: [hid, in], w2: [out, hid]) and returns
    pre-transposed, hidden-padded operands:
        w1t: [in, hid_p], b1r: [1, hid_p], w2t: [hid_p, out], b2r: [1, out]
    Zero padding of the hidden dim is exact through ReLU and the second
    matmul, so results on the real output columns are unchanged.
    Call this once at init / checkpoint load and cache the result.
    """
    hidden_size, input_size = w1.shape
    output_size = w2.shape[0]
    dtype = dtype or w1.dtype
    hid_p = _round_up(hidden_size, LANE)

    w1t = jnp.zeros((input_size, hid_p), dtype).at[:, :hidden_size].set(
        w1.T.astype(dtype))
    b1r = jnp.zeros((1, hid_p), dtype).at[0, :hidden_size].set(b1.astype(dtype))
    w2t = jnp.zeros((hid_p, output_size), dtype).at[:hidden_size, :].set(
        w2.T.astype(dtype))
    b2r = b2.reshape(1, output_size).astype(dtype)
    return w1t, b1r, w2t, b2r


def _choose_batch_block(batch, max_batch_block):
    """Pick a batch block (multiple of 8) that
       - keeps blocks <= max_batch_block,
       - gives >=2 grid steps for non-tiny batches (v7x megacore sharding),
       - wastes at most 7 padded rows (rounds against ceil(batch/nblocks),
         not against max_batch_block)."""
    if batch <= 2 * SUBLANE:
        return _round_up(batch, SUBLANE)
    nblocks = max(2, pl.cdiv(batch, max_batch_block))
    return min(max_batch_block, _round_up(pl.cdiv(batch, nblocks), SUBLANE))


def linear_qnet_forward(x, params, *, max_batch_block=512):
    """Forward pass of Linear_QNet.

    x:      [B, input_size] activations
    params: output of prepare_params() (pre-transposed / hidden-padded)
    Returns [B, output_size].
    """
    w1t, b1r, w2t, b2r = params
    batch, input_size = x.shape
    assert w1t.shape[0] == input_size, "x feature dim mismatch vs prepared w1t"
    hid_p = w1t.shape[1]
    output_size = w2t.shape[1]
    dtype = x.dtype

    # ---- batch tiling (only dimension that is padded per call) ----
    block_b = _choose_batch_block(batch, max_batch_block)
    grid_b = pl.cdiv(batch, block_b)
    batch_p = grid_b * block_b

    # Pad batch rows only when needed (no feature-dim padding, no extra copy
    # when batch already matches the tiling).
    if batch_p != batch:
        x_in = jnp.pad(x, ((0, batch_p - batch), (0, 0)))
    else:
        x_in = x

    # x stream: deeper buffering on multi-step grids to hide the DMA latency
    # behind the tiny per-tile compute. Weights/biases are grid-invariant
    # (constant index_map) and stay VMEM-resident.
    if grid_b >= 3:
        x_spec = pl.BlockSpec((block_b, input_size), lambda i: (i, 0),
                              pipeline_mode=pl.Buffered(3))
    else:
        x_spec = pl.BlockSpec((block_b, input_size), lambda i: (i, 0))

    out_padded = pl.pallas_call(
        qnet_kernel,
        out_shape=jax.ShapeDtypeStruct((batch_p, output_size), dtype),
        grid=(grid_b,),
        in_specs=[
            x_spec,                                                  # x tile
            pl.BlockSpec((input_size, hid_p), lambda i: (0, 0)),     # w1t (resident)
            pl.BlockSpec((1, hid_p), lambda i: (0, 0)),              # b1  (resident)
            pl.BlockSpec((hid_p, output_size), lambda i: (0, 0)),    # w2t (resident)
            pl.BlockSpec((1, output_size), lambda i: (0, 0)),        # b2  (resident)
        ],
        out_specs=pl.BlockSpec((block_b, output_size), lambda i: (i, 0)),
        compiler_params=pltpu.CompilerParams(
            dimension_semantics=("parallel",),  # megacore sharding on v7x
        ),
    )(x_in, w1t, b1r, w2t, b2r)

    if batch_p != batch:
        return out_padded[:batch]
    return out_padded


def init_params(key, input_size, hidden_size, output_size, dtype=jnp.float32):
    """Deterministic init mimicking torch.nn.Linear default (U[-1/sqrt(fan_in), +...])."""
    k1, k2, k3, k4 = jax.random.split(key, 4)
    bound1 = 1.0 / jnp.sqrt(jnp.float32(input_size))
    bound2 = 1.0 / jnp.sqrt(jnp.float32(hidden_size))
    w1 = jax.random.uniform(k1, (hidden_size, input_size), dtype, -bound1, bound1)
    b1 = jax.random.uniform(k2, (hidden_size,), dtype, -bound1, bound1)
    w2 = jax.random.uniform(k3, (output_size, hidden_size), dtype, -bound2, bound2)
    b2 = jax.random.uniform(k4, (output_size,), dtype, -bound2, bound2)
    return w1, b1, w2, b2


# TODO(synk): Linear_QNet.save() is host-side torch.save file I/O; no kernel equivalent.

if __name__ == "__main__":
    key = jax.random.PRNGKey(0)
    input_size, hidden_size, output_size = 16, 32, 4

    kx_small, kx_big, kp = jax.random.split(key, 3)
    w1, b1, w2, b2 = init_params(kp, input_size, hidden_size, output_size)

    # One-time parameter prep (hoisted out of the per-call hot path).
    params = prepare_params(w1, b1, w2, b2)

    def ref_fn(xx):  # pure-JAX reference, same semantics as the PyTorch forward
        return jnp.maximum(xx @ w1.T + b1, 0.0) @ w2.T + b2

    # Small, ragged batch: exercises batch-row padding + single grid step.
    x_small = jax.random.normal(kx_small, (6, input_size), jnp.float32)
    out_small = jax.block_until_ready(linear_qnet_forward(x_small, params))
    assert out_small.shape == (6, output_size)
    assert jnp.allclose(out_small, ref_fn(x_small), atol=1e-5, rtol=1e-5)

    # Larger batch: exercises 512-row blocks, a multi-step "parallel" grid
    # (both TensorCores on v7x) and the Buffered(3) x pipeline.
    x_big = jax.random.normal(kx_big, (2048, input_size), jnp.float32)
    out_big = jax.block_until_ready(linear_qnet_forward(x_big, params))
    assert out_big.shape == (2048, output_size)
    assert jnp.allclose(out_big, ref_fn(x_big), atol=1e-5, rtol=1e-5)

    print("KERNEL_OK")
</pallas_src>

<mosaic_0001>
module attributes {stable_mosaic.version = 11 : i64} {
  func.func @qnet_kernel(%arg0: i32, %arg1: memref<8x16xf32, #tpu.memory_space<vmem>>, %arg2: memref<16x128xf32, #tpu.memory_space<vmem>>, %arg3: memref<1x128xf32, #tpu.memory_space<vmem>>, %arg4: memref<128x4xf32, #tpu.memory_space<vmem>>, %arg5: memref<1x4xf32, #tpu.memory_space<vmem>>, %arg6: memref<8x4xf32, #tpu.memory_space<vmem>>) attributes {dimension_semantics = [#tpu.dimension_semantics<parallel>], iteration_bounds = array<i64: 1>, scalar_prefetch = 0 : i64, scratch_operands = 0 : i64, tpu.core_type = #tpu.core_type<tc>, window_params = [{transform_indices = @transform_0, window_bounds = array<i64: 8, 16>}, {pipeline_mode = #tpu.pipeline_mode<synchronous>, transform_indices = @transform_1, window_bounds = array<i64: 16, 128>}, {pipeline_mode = #tpu.pipeline_mode<synchronous>, transform_indices = @transform_2, window_bounds = array<i64: 1, 128>}, {pipeline_mode = #tpu.pipeline_mode<synchronous>, transform_indices = @transform_3, window_bounds = array<i64: 128, 4>}, {pipeline_mode = #tpu.pipeline_mode<synchronous>, transform_indices = @transform_4, window_bounds = array<i64: 1, 4>}, {transform_indices = @transform_5, window_bounds = array<i64: 8, 4>}]} {
    %c0 = arith.constant 0 : index
    %c0_0 = arith.constant 0 : index
    %0 = vector.load %arg1[%c0, %c0_0] : memref<8x16xf32, #tpu.memory_space<vmem>>, vector<8x16xf32>
    %c0_1 = arith.constant 0 : index
    %c0_2 = arith.constant 0 : index
    %1 = vector.load %arg2[%c0_1, %c0_2] : memref<16x128xf32, #tpu.memory_space<vmem>>, vector<16x128xf32>
    %cst = arith.constant dense<0.000000e+00> : vector<8x128xf32>
    %2 = tpu.matmul %0, %1, %cst {dimension_numbers = #tpu.dot_dimension_numbers<[1], [0], [0], [1], [0, 0, 1, 1], [], []>} : vector<8x16xf32>, vector<16x128xf32>, vector<8x128xf32> -> vector<8x128xf32>
    %c0_3 = arith.constant 0 : index
    %c0_4 = arith.constant 0 : index
    %3 = vector.load %arg3[%c0_3, %c0_4] : memref<1x128xf32, #tpu.memory_space<vmem>>, vector<1x128xf32>
    %4 = vector.broadcast %3 : vector<1x128xf32> to vector<8x128xf32>
    %5 = arith.addf %2, %4 : vector<8x128xf32>
    %cst_5 = arith.constant 0.000000e+00 : f32
    %6 = vector.broadcast %cst_5 : f32 to vector<8x128xf32>
    %7 = arith.maximumf %5, %6 : vector<8x128xf32>
    %c0_6 = arith.constant 0 : index
    %c0_7 = arith.constant 0 : index
    %8 = vector.load %arg4[%c0_6, %c0_7] : memref<128x4xf32, #tpu.memory_space<vmem>>, vector<128x4xf32>
    %cst_8 = arith.constant dense<0.000000e+00> : vector<8x4xf32>
    %9 = tpu.matmul %7, %8, %cst_8 {dimension_numbers = #tpu.dot_dimension_numbers<[1], [0], [0], [1], [0, 0, 1, 1], [], []>} : vector<8x128xf32>, vector<128x4xf32>, vector<8x4xf32> -> vector<8x4xf32>
    %c0_9 = arith.constant 0 : index
    %c0_10 = arith.constant 0 : index
    %10 = vector.load %arg5[%c0_9, %c0_10] : memref<1x4xf32, #tpu.memory_space<vmem>>, vector<1x4xf32>
    %11 = vector.broadcast %10 : vector<1x4xf32> to vector<8x4xf32>
    %12 = arith.addf %9, %11 : vector<8x4xf32>
    %c0_11 = arith.constant 0 : index
    %c0_12 = arith.constant 0 : index
    %13 = vector.load %arg6[%c0_11, %c0_12] : memref<8x4xf32, #tpu.memory_space<vmem>>, vector<8x4xf32>
    tpu.vector_store %arg6[%c0_11, %c0_12], %12 {strides = array<i32>} : memref<8x4xf32, #tpu.memory_space<vmem>>, vector<8x4xf32>,
    return
  }
  func.func @transform_0(%arg0: i32) -> (i32, i32) {
    %c0_i32 = arith.constant 0 : i32
    %c0_i32_0 = arith.constant 0 : i32
    return %arg0, %c0_i32 : i32, i32
  }
  func.func @transform_1(%arg0: i32) -> (i32, i32) {
    %c0_i32 = arith.constant 0 : i32
    %c0_i32_0 = arith.constant 0 : i32
    %c0_i32_1 = arith.constant 0 : i32
    return %c0_i32, %c0_i32_0 : i32, i32
  }
  func.func @transform_2(%arg0: i32) -> (i32, i32) {
    %c0_i32 = arith.constant 0 : i32
    %c0_i32_0 = arith.constant 0 : i32
    %c0_i32_1 = arith.constant 0 : i32
    return %c0_i32, %c0_i32_0 : i32, i32
  }
  func.func @transform_3(%arg0: i32) -> (i32, i32) {
    %c0_i32 = arith.constant 0 : i32
    %c0_i32_0 = arith.constant 0 : i32
    %c0_i32_1 = arith.constant 0 : i32
    return %c0_i32, %c0_i32_0 : i32, i32
  }
  func.func @transform_4(%arg0: i32) -> (i32, i32) {
    %c0_i32 = arith.constant 0 : i32
    %c0_i32_0 = arith.constant 0 : i32
    %c0_i32_1 = arith.constant 0 : i32
    return %c0_i32, %c0_i32_0 : i32, i32
  }
  func.func @transform_5(%arg0: i32) -> (i32, i32) {
    %c0_i32 = arith.constant 0 : i32
    %c0_i32_0 = arith.constant 0 : i32
    return %arg0, %c0_i32 : i32, i32
  }
}

</mosaic_0001>

<llo_original>
// kernel: tpu_custom_call.1
$region0: #{tpu_custom_call.1}
  #allocation0 [shape = 'u32[]', space=smem, size = 0x4, offset = 0x4, fixed_abs, tag = 'smem constant byte address 0x4 - core index']
  #allocation1 [shape = 'u32[144,128]{1,0:T(1,128)}', space=vmem, size = 0x12000, scoped, tag = 'internal scratch']
  %s0 = inlined_call_operand.vmem [shape: f32[8,16], index: 0, kind: input, shape index: {}]
  %s1 = inlined_call_operand.vmem [shape: f32[16,128], index: 1, kind: input, shape index: {}]
  %s2 = inlined_call_operand.vmem [shape: f32[1,128], index: 2, kind: input, shape index: {}]
  %s3 = inlined_call_operand.vmem [shape: f32[128,4], index: 3, kind: input, shape index: {}]
  %s4 = inlined_call_operand.vmem [shape: f32[1,4], index: 4, kind: input, shape index: {}]
  %s5 = inlined_call_operand.vmem [shape: f32[8,4], index: 5, kind: output, shape index: {}]
  %s6 = sld [smem:[#allocation0]]
  $region30: #{tpu_custom_call.1} parent=0
    _
  %s8 = ssub.s32 1, %s6
  %s9 = scalar_select 0, %s8, %s6
  // Predicated region
  $region2: #{tpu_custom_call.1} parent=0 // pred_check
    _
  $region3: #{tpu_custom_call.1} parent=0 // pred_check_branch
    %11 = sbr.rel (0) target = $region5
  $region4: #{tpu_custom_call.1} parent=0 // pred_region
    _
  $region5: #{tpu_custom_call.1} parent=0 // pred_fallthru
    _
  // Predicated region
  $region6: #{tpu_custom_call.1} parent=0 // pred_check
    _
  $region7: #{tpu_custom_call.1} parent=0 // pred_check_branch
    %13 = sbr.rel (0) target = $region9
  $region8: #{tpu_custom_call.1} parent=0 // pred_region
    _
  $region9: #{tpu_custom_call.1} parent=0 // pred_fallthru
    _
  // Predicated region
  $region10: #{tpu_custom_call.1} parent=0 // pred_check
    _
  $region11: #{tpu_custom_call.1} parent=0 // pred_check_branch
    %15 = sbr.rel (0) target = $region13
  $region12: #{tpu_custom_call.1} parent=0 // pred_region
    _
  $region13: #{tpu_custom_call.1} parent=0 // pred_fallthru
    _
  // Predicated region
  $region14: #{tpu_custom_call.1} parent=0 // pred_check
    _
  $region15: #{tpu_custom_call.1} parent=0 // pred_check_branch
    %17 = sbr.rel (0) target = $region17
  $region16: #{tpu_custom_call.1} parent=0 // pred_region
    _
  $region17: #{tpu_custom_call.1} parent=0 // pred_fallthru
    _
  // Predicated region
  $region18: #{tpu_custom_call.1} parent=0 // pred_check
    _
  $region19: #{tpu_custom_call.1} parent=0 // pred_check_branch
    %19 = sbr.rel (0) target = $region21
  $region20: #{tpu_custom_call.1} parent=0 // pred_region
    _
  $region21: #{tpu_custom_call.1} parent=0 // pred_fallthru
    _
  %v20 = vld [vmem:[%s0] sm:$0xff]
  %v21 = vld [vmem:[%s1] sm:$0xff]
  %v22 = vld [vmem:[%s1 + $0x8] sm:$0xff]
  %v23 = vld [vmem:[%s2] sm:$0x1]
  %v25 = vlaneseq
  %v26 = vshrl.u32 %v25, 7
  %v27 = vsub.s32 0, %v26
  %v28 = vrot.slane %v23, %v27
  %vm30 = vcmask 130048
  %v32 = vsel %vm30, %v20, 0
  %34 = vmatprep.subr.mxu0 0.0
  %35 = vmatpush1.msra.mxu0 0.0
  %36 = vmatprep.subr.mxu0 0.0
  %37 = vmatpush1.msra.mxu0 0.0
  %38 = vmatprep.subr.mxu0 0.0
  %39 = vmatpush1.msra.mxu0 0.0
  %40 = vmatprep.subr.mxu0 0.0
  %41 = vmatpush1.msra.mxu0 0.0
  %42 = vmatprep.subr.mxu0 0.0
  %43 = vmatpush1.msra.mxu0 0.0
  %44 = vmatprep.subr.mxu0 0.0
  %45 = vmatpush1.msra.mxu0 0.0
  %46 = vmatprep.subr.mxu0 0.0
  %47 = vmatpush1.msra.mxu0 0.0
  %48 = vmatprep.subr.mxu0 0.0
  %49 = vmatpush1.msra.mxu0 0.0
  %50 = vmatprep.subr.mxu0 0.0
  %51 = vmatpush1.msra.mxu0 0.0
  %52 = vmatprep.subr.mxu0 0.0
  %53 = vmatpush1.msra.mxu0 0.0
  %54 = vmatprep.subr.mxu0 0.0
  %55 = vmatpush1.msra.mxu0 0.0
  %56 = vmatprep.subr.mxu0 0.0
  %57 = vmatpush1.msra.mxu0 0.0
  %58 = vmatprep.subr.mxu0 0.0
  %59 = vmatpush1.msra.mxu0 0.0
  %60 = vmatprep.subr.mxu0 0.0
  %61 = vmatpush1.msra.mxu0 0.0
  %62 = vmatprep.subr.mxu0 0.0
  %63 = vmatpush1.msra.mxu0 %v22
  %64 = vmatprep.subr.mxu0 0.0
  %65 = vmatpush1.msra.mxu0 %v21
  %66 = vmatprep.subr.mxu0 0.0
  %67 = vmatpush2.msra.mxu0 0.0
  %68 = vmatprep.subr.mxu0 0.0
  %69 = vmatpush2.msra.mxu0 0.0
  %70 = vmatprep.subr.mxu0 0.0
  %71 = vmatpush2.msra.mxu0 0.0
  %72 = vmatprep.subr.mxu0 0.0
  %73 = vmatpush2.msra.mxu0 0.0
  %74 = vmatprep.subr.mxu0 0.0
  %75 = vmatpush2.msra.mxu0 0.0
  %76 = vmatprep.subr.mxu0 0.0
  %77 = vmatpush2.msra.mxu0 0.0
  %78 = vmatprep.subr.mxu0 0.0
  %79 = vmatpush2.msra.mxu0 0.0
  %80 = vmatprep.subr.mxu0 0.0
  %81 = vmatpush2.msra.mxu0 0.0
  %82 = vmatprep.subr.mxu0 0.0
  %83 = vmatpush2.msra.mxu0 0.0
  %84 = vmatprep.subr.mxu0 0.0
  %85 = vmatpush2.msra.mxu0 0.0
  %86 = vmatprep.subr.mxu0 0.0
  %87 = vmatpush2.msra.mxu0 0.0
  %88 = vmatprep.subr.mxu0 0.0
  %89 = vmatpush2.msra.mxu0 0.0
  %90 = vmatprep.subr.mxu0 0.0
  %91 = vmatpush2.msra.mxu0 0.0
  %92 = vmatprep.subr.mxu0 0.0
  %93 = vmatpush2.msra.mxu0 0.0
  %94 = vmatprep.subr.mxu0 0.0
  %95 = vmatpush2.msra.mxu0 0.0
  %96 = vmatprep.subr.mxu0 0.0
  %97 = vmatpush2.msra.mxu0 0.0
  %98 = vmatprep.mubr.f32.mxu0 0.0
  %99 = vmatmul.mubr.f32.gmra.mxu0 %v32
  %v100 = vpop.f32.mrf.mxu0
  %v101 = vadd.f32 %v28, %v100
  %v102 = vpop.f32.mrf.mxu0
  %103 = vdwg.mxu0
  %v104 = vmax.f32 %v101, 0.0
  %v105 = vld [vmem:[%s3] sm:$0xff]
  %v106 = vld [vmem:[%s3 + $0x8] sm:$0xff]
  %v107 = vld [vmem:[%s3 + $0x10] sm:$0xff]
  %v108 = vld [vmem:[%s3 + $0x18] sm:$0xff]
  %v109 = vld [vmem:[%s3 + $0x20] sm:$0xff]
  %v110 = vld [vmem:[%s3 + $0x28] sm:$0xff]
  %v111 = vld [vmem:[%s3 + $0x30] sm:$0xff]
  %v112 = vld [vmem:[%s3 + $0x38] sm:$0xff]
  %v113 = vld [vmem:[%s3 + $0x40] sm:$0xff]
  %v114 = vld [vmem:[%s3 + $0x48] sm:$0xff]
  %v115 = vld [vmem:[%s3 + $0x50] sm:$0xff]
  %v116 = vld [vmem:[%s3 + $0x58] sm:$0xff]
  %v117 = vld [vmem:[%s3 + $0x60] sm:$0xff]
  %v118 = vld [vmem:[%s3 + $0x68] sm:$0xff]
  %v119 = vld [vmem:[%s3 + $0x70] sm:$0xff]
  %v120 = vld [vmem:[%s3 + $0x78] sm:$0xff]
  %v121 = vld [vmem:[%s4] sm:$0x1]
  %v123 = vlaneseq
  %v124 = vshrl.u32 %v123, 7
  %v125 = vsub.s32 0, %v124
  %v126 = vrot.slane %v121, %v125
  %128 = vmatprep.subr.mxu0 0.0
  %129 = vmatpush1.msra.mxu0 %v120
  %130 = vmatprep.subr.mxu0 0.0
  %131 = vmatpush1.msra.mxu0 %v119
  %132 = vmatprep.subr.mxu0 0.0
  %133 = vmatpush1.msra.mxu0 %v118
  %134 = vmatprep.subr.mxu0 0.0
  %135 = vmatpush1.msra.mxu0 %v117
  %136 = vmatprep.subr.mxu0 0.0
  %137 = vmatpush1.msra.mxu0 %v116
  %138 = vmatprep.subr.mxu0 0.0
  %139 = vmatpush1.msra.mxu0 %v115
  %140 = vmatprep.subr.mxu0 0.0
  %141 = vmatpush1.msra.mxu0 %v114
  %142 = vmatprep.subr.mxu0 0.0
  %143 = vmatpush1.msra.mxu0 %v113
  %144 = vmatprep.subr.mxu0 0.0
  %145 = vmatpush1.msra.mxu0 %v112
  %146 = vmatprep.subr.mxu0 0.0
  %147 = vmatpush1.msra.mxu0 %v111
  %148 = vmatprep.subr.mxu0 0.0
  %149 = vmatpush1.msra.mxu0 %v110
  %150 = vmatprep.subr.mxu0 0.0
  %151 = vmatpush1.msra.mxu0 %v109
  %152 = vmatprep.subr.mxu0 0.0
  %153 = vmatpush1.msra.mxu0 %v108
  %154 = vmatprep.subr.mxu0 0.0
  %155 = vmatpush1.msra.mxu0 %v107
  %156 = vmatprep.subr.mxu0 0.0
  %157 = vmatpush1.msra.mxu0 %v106
  %158 = vmatprep.subr.mxu0 0.0
  %159 = vmatpush1.msra.mxu0 %v105
  %160 = vmatprep.subr.mxu0 0.0
  %161 = vmatpush2.msra.mxu0 0.0
  %162 = vmatprep.subr.mxu0 0.0
  %163 = vmatpush2.msra.mxu0 0.0
  %164 = vmatprep.subr.mxu0 0.0
  %165 = vmatpush2.msra.mxu0 0.0
  %166 = vmatprep.subr.mxu0 0.0
  %167 = vmatpush2.msra.mxu0 0.0
  %168 = vmatprep.subr.mxu0 0.0
  %169 = vmatpush2.msra.mxu0 0.0
  %170 = vmatprep.subr.mxu0 0.0
  %171 = vmatpush2.msra.mxu0 0.0
  %172 = vmatprep.subr.mxu0 0.0
  %173 = vmatpush2.msra.mxu0 0.0
  %174 = vmatprep.subr.mxu0 0.0
  %175 = vmatpush2.msra.mxu0 0.0
  %176 = vmatprep.subr.mxu0 0.0
  %177 = vmatpush2.msra.mxu0 0.0
  %178 = vmatprep.subr.mxu0 0.0
  %179 = vmatpush2.msra.mxu0 0.0
  %180 = vmatprep.subr.mxu0 0.0
  %181 = vmatpush2.msra.mxu0 0.0
  %182 = vmatprep.subr.mxu0 0.0
  %183 = vmatpush2.msra.mxu0 0.0
  %184 = vmatprep.subr.mxu0 0.0
  %185 = vmatpush2.msra.mxu0 0.0
  %186 = vmatprep.subr.mxu0 0.0
  %187 = vmatpush2.msra.mxu0 0.0
  %188 = vmatprep.subr.mxu0 0.0
  %189 = vmatpush2.msra.mxu0 0.0
  %190 = vmatprep.subr.mxu0 0.0
  %191 = vmatpush2.msra.mxu0 0.0
  %192 = vmatprep.mubr.f32.mxu0 0.0
  %193 = vmatmul.mubr.f32.gmra.mxu0 %v104
  %v194 = vpop.f32.mrf.mxu0
  %v195 = vadd.f32 %v126, %v194
  %v196 = vpop.f32.mrf.mxu0
  %197 = vdwg.mxu0
  %vm198 = vcmask 31744
  %199 = vst.msk [vmem:[%s5] sm:$0xff] %vm198, %v195
  // Predicated region
  $region22: #{tpu_custom_call.1} parent=0 // pred_check
    _
  $region23: #{tpu_custom_call.1} parent=0 // pred_check_branch
    %201 = sbr.rel (0) target = $region25
  $region24: #{tpu_custom_call.1} parent=0 // pred_region
    _
  $region25: #{tpu_custom_call.1} parent=0 // pred_fallthru
    _
  // Predicated region
  $region26: #{tpu_custom_call.1} parent=0 // pred_check
    _
  $region27: #{tpu_custom_call.1} parent=0 // pred_check_branch
    %203 = sbr.rel (0) target = $region29
  $region28: #{tpu_custom_call.1} parent=0 // pred_region
    _
  $region29: #{tpu_custom_call.1} parent=0 // pred_fallthru
    _

</llo_original>
